<compile_context>
chip_gen: v7x
topology: tpu7x:2x2x1
jax: 0.10.0
libtpu: 0.0.40
codegen_flags: <defaults>
</compile_context>

<pallas_src>
import jax
import jax.numpy as jnp
import numpy as np
from jax.experimental import pallas as pl
from jax.experimental.pallas import tpu as pltpu

# problem sizes (small, deterministic)
N = 16        # number of nodes
DIN = 32      # in_feats
H = 4         # num_heads
F = 16        # out_feats
LANE_PAD = 128              # pad rhs / output last dim to a full vreg width
NEG_SLOPE = 0.2             # python floats (NOT jnp scalars) so the kernel
NEG_INF = -1e30             # does not capture traced constants
DENOM_EPS = 1e-20


def gat_kernel(feat_ref, w_ref, attn_ref, adj_bias_ref, agg_mask_ref,
               scale_exp_ref, bias_ref, out_ref):
    # feat_ref:      (N, DIN)        node features
    # w_ref:         (DIN, H*F)      fc weight (already transposed: y = x @ w)
    # attn_ref:      (H*F, 128)      cols [0, H*N): attn_r expanded per head
    #                                block; cols [H*N, H*N+H): attn_l; rest 0
    # adj_bias_ref:  (N, H*N)        additive mask, 0 on edges / -1e30 off,
    #                                tiled per head (lane-packed)
    # agg_mask_ref:  (H*N, 128)      block-diag head mask (cols [0,H*F)) plus
    #                                per-head denom selector (cols [H*F,H*F+H))
    # scale_exp_ref: (H, 128)        1/denom lane expander (block-ones)
    # bias_ref:      (1, 128)        bias padded with zeros past H*F
    # out_ref:       (N, 128)        padded output, [:, :H*F] is the result
    feat = feat_ref[...]
    w = w_ref[...]

    # hot path 1: feature projection on the MXU
    proj = jnp.dot(feat, w, preferred_element_type=jnp.float32)          # (N, H*F)

    # el / er for ALL heads in ONE MXU matmul; er arrives already lane-expanded
    # per head block (column h*N+j holds er[:, h]).
    el_erx = jnp.dot(proj, attn_ref[...],
                     preferred_element_type=jnp.float32)                 # (N, 128)
    er_exp = el_erx[:, :H * N]                                           # (N, H*N)
    el = el_erx[:, H * N:H * N + H]                                      # (N, H)

    # single hoisted transpose of el; flatten head-major along lanes by concat
    # (avoids an unsupported (H, N) -> (1, H*N) reshape relayout).
    el_t = jnp.transpose(el)                                             # (H, N)
    el_row = jnp.concatenate([el_t[h:h + 1, :] for h in range(H)],
                             axis=1)                                     # (1, H*N)

    # lane-packed score slab for all heads: ONE lrelu / mask / exp pass
    s = er_exp + el_row                                                  # (N, H*N)
    s = jnp.where(s > 0, s, NEG_SLOPE * s)                               # leaky relu
    s = s + adj_bias_ref[...]                                            # additive mask

    # shared per-row max (softmax is shift-invariant per head); masked lanes
    # underflow to exactly 0 in the exp (every row has >=1 edge: self-loops).
    m = jnp.max(s, axis=-1, keepdims=True)                               # (N, 1)
    p = jnp.exp(s - m)                                                   # (N, H*N)

    # block-diagonal rhs: per-head proj slices + per-head ones column so the
    # same matmul also yields the softmax denominators.
    proj_pad = jnp.concatenate(
        [proj, jnp.ones((N, LANE_PAD - H * F), jnp.float32)], axis=-1)   # (N, 128)
    rhs = agg_mask_ref[...] * jnp.concatenate([proj_pad] * H, axis=0)    # (H*N, 128)

    # hot path 2: ALL heads' aggregation + per-head denominators in ONE matmul
    agg = jnp.dot(p, rhs, preferred_element_type=jnp.float32)            # (N, 128)

    # normalize AFTER the matmul: scale the per-head (N, F) result, not alpha
    denom = jnp.maximum(agg[:, H * F:H * F + H], DENOM_EPS)              # (N, H)
    inv = pl.reciprocal(denom, approx=False)   # exact: keeps the 1e-5 check
    scale = jnp.dot(inv, scale_exp_ref[...],
                    preferred_element_type=jnp.float32)                  # (N, 128)

    # one lane-dense (N, 128) store; bias added once (padded cols end up 0)
    out_ref[...] = agg * scale + bias_ref[...]


def gat_forward(feat, w, attn_comb, adj_bias, agg_mask, scale_exp, bias_pad):
    out = pl.pallas_call(
        gat_kernel,
        out_shape=jax.ShapeDtypeStruct((N, LANE_PAD), jnp.float32),
        in_specs=[pl.BlockSpec(memory_space=pltpu.MemorySpace.VMEM)] * 7,
        out_specs=pl.BlockSpec(memory_space=pltpu.MemorySpace.VMEM),
    )(feat, w, attn_comb, adj_bias, agg_mask, scale_exp, bias_pad)
    return out[:, :H * F].reshape(N, H, F)


def gat_reference(feat, w, attn_l, attn_r, adj, bias):
    """Pure-JAX reference for correctness checking."""
    proj = (feat @ w).reshape(N, H, F)
    el = jnp.sum(proj * attn_l[None], axis=-1)                    # (N, H)
    er = jnp.sum(proj * attn_r[None], axis=-1)                    # (N, H)
    e = er[:, None, :] + el[None, :, :]                           # (dst, src, H)
    e = jnp.where(e > 0, e, NEG_SLOPE * e)
    mask = (adj > 0)[:, :, None]
    e = jnp.where(mask, e, NEG_INF)
    p = jnp.exp(e - jnp.max(e, axis=1, keepdims=True))
    p = jnp.where(mask, p, 0.0)
    alpha = p / jnp.sum(p, axis=1, keepdims=True)
    rst = jnp.einsum('dsh,shf->dhf', alpha, proj)
    return rst + bias.reshape(1, H, F)


def xavier_normal(key, shape, fan_in, fan_out, gain):
    std = gain * np.sqrt(2.0 / (fan_in + fan_out))
    return jax.random.normal(key, shape, dtype=jnp.float32) * std


def build_attn_comb(attn_l, attn_r):
    """(H*F, 128): proj @ A gives [er expanded per head block | el | zeros]."""
    A = np.zeros((H * F, LANE_PAD), dtype=np.float32)
    al = np.asarray(attn_l)
    ar = np.asarray(attn_r)
    for h in range(H):
        A[h * F:(h + 1) * F, h * N:(h + 1) * N] = ar[h][:, None]   # er_exp block
        A[h * F:(h + 1) * F, H * N + h] = al[h]                    # el column
    return jnp.asarray(A)


def build_agg_mask():
    """(H*N, 128): block-diag head mask + per-head denom ones selector."""
    M = np.zeros((H * N, LANE_PAD), dtype=np.float32)
    for h in range(H):
        M[h * N:(h + 1) * N, h * F:(h + 1) * F] = 1.0   # head-h proj block
        M[h * N:(h + 1) * N, H * F + h] = 1.0           # head-h denom column
    return jnp.asarray(M)


def build_scale_expander():
    """(H, 128): inv_denom (N,H) @ S broadcasts 1/denom over each head's F lanes."""
    S = np.zeros((H, LANE_PAD), dtype=np.float32)
    for h in range(H):
        S[h, h * F:(h + 1) * F] = 1.0
    return jnp.asarray(S)


def build_adj_bias(adj):
    """(N, H*N) additive mask: 0 on edges, NEG_INF off edges, tiled per head."""
    b = np.where(np.asarray(adj) > 0, 0.0, NEG_INF).astype(np.float32)   # (N, N)
    return jnp.asarray(np.tile(b, (1, H)))


if __name__ == "__main__":
    key = jax.random.PRNGKey(0)
    k_feat, k_w, k_al, k_ar, k_adj = jax.random.split(key, 5)

    gain = float(np.sqrt(2.0))  # nn.init.calculate_gain('relu')

    # node features
    feat = jax.random.normal(k_feat, (N, DIN), dtype=jnp.float32)

    # fc.weight: torch shape (H*F, DIN); we store the transpose for x @ w
    w_t = xavier_normal(k_w, (H * F, DIN), fan_in=DIN, fan_out=H * F, gain=gain)
    w = jnp.transpose(w_t)                                        # (DIN, H*F)

    # attn_l / attn_r: torch shape (1, H, F) -> stored as (H, F)
    attn_l = xavier_normal(k_al, (H, F), fan_in=F, fan_out=H, gain=gain)
    attn_r = xavier_normal(k_ar, (H, F), fan_in=F, fan_out=H, gain=gain)
    attn_comb = build_attn_comb(attn_l, attn_r)                   # (H*F, 128)

    # bias: reset_parameters() sets it to zeros
    bias = jnp.zeros((1, H * F), dtype=jnp.float32)
    bias_pad = jnp.zeros((1, LANE_PAD), dtype=jnp.float32).at[:, :H * F].set(bias)

    # dense adjacency adj[dst, src]; self-loops guarantee no zero in-degree
    adj = jax.random.bernoulli(k_adj, p=0.3, shape=(N, N)).astype(jnp.float32)
    adj = jnp.maximum(adj, jnp.eye(N, dtype=jnp.float32))

    adj_bias = build_adj_bias(adj)                                # (N, H*N)
    agg_mask = build_agg_mask()                                   # (H*N, 128)
    scale_exp = build_scale_expander()                            # (H, 128)

    out = gat_forward(feat, w, attn_comb, adj_bias, agg_mask, scale_exp, bias_pad)
    jax.block_until_ready(out)

    ref = gat_reference(feat, w, attn_l, attn_r, adj, bias)
    np.testing.assert_allclose(np.asarray(out), np.asarray(ref), rtol=1e-5, atol=1e-5)

    print("KERNEL_OK")
</pallas_src>

<mosaic_0001>
module attributes {stable_mosaic.version = 11 : i64} {
  func.func @gat_kernel(%arg0: memref<16x32xf32, #tpu.memory_space<vmem>>, %arg1: memref<32x64xf32, #tpu.memory_space<vmem>>, %arg2: memref<64x128xf32, #tpu.memory_space<vmem>>, %arg3: memref<16x64xf32, #tpu.memory_space<vmem>>, %arg4: memref<64x128xf32, #tpu.memory_space<vmem>>, %arg5: memref<4x128xf32, #tpu.memory_space<vmem>>, %arg6: memref<1x128xf32, #tpu.memory_space<vmem>>, %arg7: memref<16x128xf32, #tpu.memory_space<vmem>>) attributes {dimension_semantics = [], scalar_prefetch = 0 : i64, scratch_operands = 0 : i64, tpu.core_type = #tpu.core_type<tc>} {
    %c0 = arith.constant 0 : index
    %c0_0 = arith.constant 0 : index
    %0 = vector.load %arg0[%c0, %c0_0] : memref<16x32xf32, #tpu.memory_space<vmem>>, vector<16x32xf32>
    %c0_1 = arith.constant 0 : index
    %c0_2 = arith.constant 0 : index
    %1 = vector.load %arg1[%c0_1, %c0_2] : memref<32x64xf32, #tpu.memory_space<vmem>>, vector<32x64xf32>
    %cst = arith.constant dense<0.000000e+00> : vector<16x64xf32>
    %2 = tpu.matmul %0, %1, %cst {dimension_numbers = #tpu.dot_dimension_numbers<[1], [0], [0], [1], [0, 0, 1, 1], [], []>} : vector<16x32xf32>, vector<32x64xf32>, vector<16x64xf32> -> vector<16x64xf32>
    %c0_3 = arith.constant 0 : index
    %c0_4 = arith.constant 0 : index
    %3 = vector.load %arg2[%c0_3, %c0_4] : memref<64x128xf32, #tpu.memory_space<vmem>>, vector<64x128xf32>
    %cst_5 = arith.constant dense<0.000000e+00> : vector<16x128xf32>
    %4 = tpu.matmul %2, %3, %cst_5 {dimension_numbers = #tpu.dot_dimension_numbers<[1], [0], [0], [1], [0, 0, 1, 1], [], []>} : vector<16x64xf32>, vector<64x128xf32>, vector<16x128xf32> -> vector<16x128xf32>
    %5 = vector.extract_strided_slice %4 {offsets = [0, 0], sizes = [16, 64], strides = [1, 1]} : vector<16x128xf32> to vector<16x64xf32>
    %6 = vector.extract_strided_slice %4 {offsets = [0, 64], sizes = [16, 4], strides = [1, 1]} : vector<16x128xf32> to vector<16x4xf32>
    %7 = tpu.transpose %6, [1, 0] : vector<16x4xf32> -> vector<4x16xf32>
    %8 = vector.extract_strided_slice %7 {offsets = [0, 0], sizes = [1, 16], strides = [1, 1]} : vector<4x16xf32> to vector<1x16xf32>
    %9 = vector.extract_strided_slice %7 {offsets = [1, 0], sizes = [1, 16], strides = [1, 1]} : vector<4x16xf32> to vector<1x16xf32>
    %10 = vector.extract_strided_slice %7 {offsets = [2, 0], sizes = [1, 16], strides = [1, 1]} : vector<4x16xf32> to vector<1x16xf32>
    %11 = vector.extract_strided_slice %7 {offsets = [3, 0], sizes = [1, 16], strides = [1, 1]} : vector<4x16xf32> to vector<1x16xf32>
    %12 = tpu.concatenate %8, %9, %10, %11 in 1 : vector<1x16xf32>, vector<1x16xf32>, vector<1x16xf32>, vector<1x16xf32> -> vector<1x64xf32>
    %13 = vector.broadcast %12 : vector<1x64xf32> to vector<16x64xf32>
    %14 = arith.addf %5, %13 : vector<16x64xf32>
    %cst_6 = arith.constant 0.000000e+00 : f32
    %15 = vector.broadcast %cst_6 : f32 to vector<16x64xf32>
    %16 = arith.cmpf ogt, %14, %15 : vector<16x64xf32>
    %cst_7 = arith.constant 2.000000e-01 : f32
    %17 = vector.broadcast %cst_7 : f32 to vector<16x64xf32>
    %18 = arith.mulf %17, %14 : vector<16x64xf32>
    %19 = arith.select %16, %14, %18 : vector<16x64xi1>, vector<16x64xf32>
    %c0_8 = arith.constant 0 : index
    %c0_9 = arith.constant 0 : index
    %20 = vector.load %arg3[%c0_8, %c0_9] : memref<16x64xf32, #tpu.memory_space<vmem>>, vector<16x64xf32>
    %21 = arith.addf %19, %20 : vector<16x64xf32>
    %cst_10 = arith.constant dense<0xFF800000> : vector<16xf32>
    %22 = vector.multi_reduction <maximumf>, %21, %cst_10 [1] : vector<16x64xf32> to vector<16xf32>
    %23 = vector.shape_cast %22 : vector<16xf32> to vector<16x1xf32>
    %24 = vector.broadcast %23 : vector<16x1xf32> to vector<16x64xf32>
    %25 = arith.subf %21, %24 : vector<16x64xf32>
    %26 = math.exp %25 : vector<16x64xf32>
    %cst_11 = arith.constant 1.000000e+00 : f32
    %27 = vector.broadcast %cst_11 : f32 to vector<16x64xf32>
    %28 = tpu.concatenate %2, %27 in 1 : vector<16x64xf32>, vector<16x64xf32> -> vector<16x128xf32>
    %c0_12 = arith.constant 0 : index
    %c0_13 = arith.constant 0 : index
    %29 = vector.load %arg4[%c0_12, %c0_13] : memref<64x128xf32, #tpu.memory_space<vmem>>, vector<64x128xf32>
    %30 = tpu.concatenate %28, %28, %28, %28 in 0 : vector<16x128xf32>, vector<16x128xf32>, vector<16x128xf32>, vector<16x128xf32> -> vector<64x128xf32>
    %31 = arith.mulf %29, %30 : vector<64x128xf32>
    %cst_14 = arith.constant dense<0.000000e+00> : vector<16x128xf32>
    %32 = tpu.matmul %26, %31, %cst_14 {dimension_numbers = #tpu.dot_dimension_numbers<[1], [0], [0], [1], [0, 0, 1, 1], [], []>} : vector<16x64xf32>, vector<64x128xf32>, vector<16x128xf32> -> vector<16x128xf32>
    %33 = vector.extract_strided_slice %32 {offsets = [0, 64], sizes = [16, 4], strides = [1, 1]} : vector<16x128xf32> to vector<16x4xf32>
    %cst_15 = arith.constant 9.99999968E-21 : f32
    %34 = vector.broadcast %cst_15 : f32 to vector<16x4xf32>
    %35 = arith.maximumf %33, %34 : vector<16x4xf32>
    %36 = tpu.reciprocal %35 : vector<16x4xf32> -> vector<16x4xf32>
    %c0_16 = arith.constant 0 : index
    %c0_17 = arith.constant 0 : index
    %37 = vector.load %arg5[%c0_16, %c0_17] : memref<4x128xf32, #tpu.memory_space<vmem>>, vector<4x128xf32>
    %cst_18 = arith.constant dense<0.000000e+00> : vector<16x128xf32>
    %38 = tpu.matmul %36, %37, %cst_18 {dimension_numbers = #tpu.dot_dimension_numbers<[1], [0], [0], [1], [0, 0, 1, 1], [], []>} : vector<16x4xf32>, vector<4x128xf32>, vector<16x128xf32> -> vector<16x128xf32>
    %39 = arith.mulf %32, %38 : vector<16x128xf32>
    %c0_19 = arith.constant 0 : index
    %c0_20 = arith.constant 0 : index
    %40 = vector.load %arg6[%c0_19, %c0_20] : memref<1x128xf32, #tpu.memory_space<vmem>>, vector<1x128xf32>
    %41 = vector.broadcast %40 : vector<1x128xf32> to vector<16x128xf32>
    %42 = arith.addf %39, %41 : vector<16x128xf32>
    %c0_21 = arith.constant 0 : index
    %c0_22 = arith.constant 0 : index
    %43 = vector.load %arg7[%c0_21, %c0_22] : memref<16x128xf32, #tpu.memory_space<vmem>>, vector<16x128xf32>
    tpu.vector_store %arg7[%c0_21, %c0_22], %42 {strides = array<i32>} : memref<16x128xf32, #tpu.memory_space<vmem>>, vector<16x128xf32>,
    return
  }
}

</mosaic_0001>

<llo_original>
// kernel: tpu_custom_call.1
$region0: #{tpu_custom_call.1}
  #allocation0 [shape = 'u32[]', space=smem, size = 0x4, offset = 0x4, fixed_abs, tag = 'smem constant byte address 0x4 - core index']
  #allocation1 [shape = 'u32[144,128]{1,0:T(1,128)}', space=vmem, size = 0x12000, scoped, tag = 'internal scratch']
  %s0 = inlined_call_operand.hbm [shape: f32[16,32], index: 0, kind: input, shape index: {}]
  %s1 = inlined_call_operand.hbm [shape: f32[32,64], index: 1, kind: input, shape index: {}]
  %s2 = inlined_call_operand.hbm [shape: f32[64,128], index: 2, kind: input, shape index: {}]
  %s3 = inlined_call_operand.hbm [shape: f32[16,64], index: 3, kind: input, shape index: {}]
  %s4 = inlined_call_operand.hbm [shape: f32[64,128], index: 4, kind: input, shape index: {}]
  %s5 = inlined_call_operand.vmem [shape: f32[4,128], index: 5, kind: input, shape index: {}]
  %s6 = inlined_call_operand.vmem [shape: f32[1,128], index: 6, kind: input, shape index: {}]
  %s7 = inlined_call_operand.hbm [shape: f32[16,128], index: 7, kind: output, shape index: {}]
  %s8 = sld [smem:[#allocation0]]
  $region58: #{tpu_custom_call.1} parent=0
    _
  %s10 = ssub.s32 1, %s8
  %s11 = scalar_select 0, %s10, %s8
  $region1: #{tpu_custom_call.1} parent=0
    #allocation2 [shape = 'u8[8192]{0}', space=vmem, size = 0x2000, scoped, tag = 'input window, operand 0, single buffered']
    #allocation3 [shape = 's32[1]{0}', space=sflag, size = 0x4, scoped, tag = 'scoped memory for tpu_custom_call.1']
    #allocation4 [shape = 's32[1]{0}', space=sflag, size = 0x4, scoped, tag = 'scoped memory for tpu_custom_call.1']
    #allocation5 [shape = 'u8[16384]{0}', space=vmem, size = 0x4000, scoped, tag = 'input window, operand 1, single buffered']
    #allocation6 [shape = 's32[1]{0}', space=sflag, size = 0x4, scoped, tag = 'scoped memory for tpu_custom_call.1']
    #allocation7 [shape = 'u8[32768]{0}', space=vmem, size = 0x8000, scoped, tag = 'input window, operand 2, single buffered']
    #allocation8 [shape = 'u8[8192]{0}', space=vmem, size = 0x2000, scoped, tag = 'input window, operand 3, single buffered']
    #allocation9 [shape = 's32[1]{0}', space=sflag, size = 0x4, scoped, tag = 'scoped memory for tpu_custom_call.1']
    #allocation10 [shape = 'u8[32768]{0}', space=vmem, size = 0x8000, scoped, tag = 'input window, operand 4, single buffered']
    #allocation11 [shape = 'u8[8192]{0}', space=vmem, size = 0x2000, scoped, tag = 'output window, operand 0, single buffered']
    %12 = vsyncpa [#allocation3], 0
    %13 = vsyncpa [#allocation6], 0
    %14 = vsyncpa [#allocation9], 0
    %15 = vsyncpa [#allocation4], 0
    // Predicated region
    $region2: #{tpu_custom_call.1} parent=1 // pred_check
      _
    $region3: #{tpu_custom_call.1} parent=1 // pred_check_branch
      %17 = sbr.rel (0) target = $region5
    $region4: #{tpu_custom_call.1} parent=1 // pred_region
      %s19 = ssub.s32 256, 256
      %20 = vsyncadd [#allocation3], %s19
      %s21 = sshll.u32 [#allocation2], 4
      %s22 = int_to_ptr.vmem [resolvable:$true] %s21
      %27 = dma.hbm_to_vmem [thread:$0]  %s0, 256, %s22, [#allocation3], 128, 128, 8
    $region5: #{tpu_custom_call.1} parent=1 // pred_fallthru
      _
    // Predicated region
    $region6: #{tpu_custom_call.1} parent=1 // pred_check
      _
    $region7: #{tpu_custom_call.1} parent=1 // pred_check_branch
      %29 = sbr.rel (0) target = $region9
    $region8: #{tpu_custom_call.1} parent=1 // pred_region
      %s31 = ssub.s32 512, 512
      %32 = vsyncadd [#allocation6], %s31
      %s33 = sshll.u32 [#allocation5], 4
      %s34 = int_to_ptr.vmem [resolvable:$true] %s33
      %39 = dma.hbm_to_vmem [thread:$0]  %s1, 512, %s34, [#allocation6], 128, 128, 8
    $region9: #{tpu_custom_call.1} parent=1 // pred_fallthru
      _
    // Predicated region
    $region10: #{tpu_custom_call.1} parent=1 // pred_check
      _
    $region11: #{tpu_custom_call.1} parent=1 // pred_check_branch
      %41 = sbr.rel (0) target = $region13
    $region12: #{tpu_custom_call.1} parent=1 // pred_region
      %s43 = ssub.s32 1024, 1024
      %44 = vsyncadd [#allocation6], %s43
      %s45 = sshll.u32 [#allocation7], 4
      %s46 = int_to_ptr.vmem [resolvable:$true] %s45
      %51 = dma.hbm_to_vmem [thread:$0]  %s2, 1024, %s46, [#allocation6], 128, 128, 8
    $region13: #{tpu_custom_call.1} parent=1 // pred_fallthru
      _
    // Predicated region
    $region14: #{tpu_custom_call.1} parent=1 // pred_check
      _
    $region15: #{tpu_custom_call.1} parent=1 // pred_check_branch
      %53 = sbr.rel (0) target = $region17
    $region16: #{tpu_custom_call.1} parent=1 // pred_region
      %s55 = ssub.s32 256, 256
      %56 = vsyncadd [#allocation9], %s55
      %s57 = sshll.u32 [#allocation8], 4
      %s58 = int_to_ptr.vmem [resolvable:$true] %s57
      %63 = dma.hbm_to_vmem [thread:$0]  %s3, 256, %s58, [#allocation9], 128, 128, 8
    $region17: #{tpu_custom_call.1} parent=1 // pred_fallthru
      _
    // Predicated region
    $region18: #{tpu_custom_call.1} parent=1 // pred_check
      _
    $region19: #{tpu_custom_call.1} parent=1 // pred_check_branch
      %65 = sbr.rel (0) target = $region21
    $region20: #{tpu_custom_call.1} parent=1 // pred_region
      %s67 = ssub.s32 1024, 1024
      %68 = vsyncadd [#allocation9], %s67
      %s69 = sshll.u32 [#allocation10], 4
      %s70 = int_to_ptr.vmem [resolvable:$true] %s69
      %75 = dma.hbm_to_vmem [thread:$0]  %s4, 1024, %s70, [#allocation9], 128, 128, 8
    $region21: #{tpu_custom_call.1} parent=1 // pred_fallthru
      _
    // Predicated region
    $region22: #{tpu_custom_call.1} parent=1 // pred_check
      _
    $region23: #{tpu_custom_call.1} parent=1 // pred_check_branch
      %77 = sbr.rel (0) target = $region25
    $region24: #{tpu_custom_call.1} parent=1 // pred_region
      _
    $region25: #{tpu_custom_call.1} parent=1 // pred_fallthru
      _
    // Predicated region
    $region26: #{tpu_custom_call.1} parent=1 // pred_check
      _
    $region27: #{tpu_custom_call.1} parent=1 // pred_check_branch
      %79 = sbr.rel (0) target = $region29
    $region28: #{tpu_custom_call.1} parent=1 // pred_region
      _
    $region29: #{tpu_custom_call.1} parent=1 // pred_fallthru
      _
    // Predicated region
    $region30: #{tpu_custom_call.1} parent=1 // pred_check
      _
    $region31: #{tpu_custom_call.1} parent=1 // pred_check_branch
      %81 = sbr.rel (0) target = $region33
    $region32: #{tpu_custom_call.1} parent=1 // pred_region
      %82 = dma.done [#allocation3], 256
    $region33: #{tpu_custom_call.1} parent=1 // pred_fallthru
      _
    // Predicated region
    $region34: #{tpu_custom_call.1} parent=1 // pred_check
      _
    $region35: #{tpu_custom_call.1} parent=1 // pred_check_branch
      %84 = sbr.rel (0) target = $region37
    $region36: #{tpu_custom_call.1} parent=1 // pred_region
      %85 = dma.done [#allocation6], 512
    $region37: #{tpu_custom_call.1} parent=1 // pred_fallthru
      _
    // Predicated region
    $region38: #{tpu_custom_call.1} parent=1 // pred_check
      _
    $region39: #{tpu_custom_call.1} parent=1 // pred_check_branch
      %87 = sbr.rel (0) target = $region41
    $region40: #{tpu_custom_call.1} parent=1 // pred_region
      %88 = dma.done [#allocation6], 1024
    $region41: #{tpu_custom_call.1} parent=1 // pred_fallthru
      _
    // Predicated region
    $region42: #{tpu_custom_call.1} parent=1 // pred_check
      _
    $region43: #{tpu_custom_call.1} parent=1 // pred_check_branch
      %90 = sbr.rel (0) target = $region45
    $region44: #{tpu_custom_call.1} parent=1 // pred_region
      %91 = dma.done [#allocation9], 256
    $region45: #{tpu_custom_call.1} parent=1 // pred_fallthru
      _
    // Predicated region
    $region46: #{tpu_custom_call.1} parent=1 // pred_check
      _
    $region47: #{tpu_custom_call.1} parent=1 // pred_check_branch
      %93 = sbr.rel (0) target = $region49
    $region48: #{tpu_custom_call.1} parent=1 // pred_region
      %94 = dma.done [#allocation9], 1024
    $region49: #{tpu_custom_call.1} parent=1 // pred_fallthru
      _
    %v95 = vld [vmem:[#allocation2] sm:$0xff]
    %v96 = vld [vmem:[#allocation2 + $0x8] sm:$0xff]
    %v97 = vld [vmem:[#allocation5] sm:$0xff]
    %v98 = vld [vmem:[#allocation5 + $0x8] sm:$0xff]
    %v99 = vld [vmem:[#allocation5 + $0x10] sm:$0xff]
    %v100 = vld [vmem:[#allocation5 + $0x18] sm:$0xff]
    %vm101 = vcmask 261120
    %v103 = vsel %vm101, %v95, 0
    %v106 = vsel %vm101, %v96, 0
    %108 = vmatprep.subr.mxu0 0.0
    %109 = vmatpush1.msra.mxu0 %v97
    %110 = vmatprep.subr.mxu0 0.0
    %111 = vmatpush1.msra.mxu0 %v98
    %112 = vmatprep.subr.mxu0 0.0
    %113 = vmatpush1.msra.mxu0 %v99
    %114 = vmatprep.subr.mxu0 0.0
    %115 = vmatpush1.msra.mxu0 %v100
    %116 = vmatprep.subr.mxu0 0.0
    %117 = vmatpush1.msra.mxu0 0.0
    %118 = vmatprep.subr.mxu0 0.0
    %119 = vmatpush1.msra.mxu0 0.0
    %120 = vmatprep.subr.mxu0 0.0
    %121 = vmatpush1.msra.mxu0 0.0
    %122 = vmatprep.subr.mxu0 0.0
    %123 = vmatpush1.msra.mxu0 0.0
    %124 = vmatprep.subr.mxu0 0.0
    %125 = vmatpush1.msra.mxu0 0.0
    %126 = vmatprep.subr.mxu0 0.0
    %127 = vmatpush1.msra.mxu0 0.0
    %128 = vmatprep.subr.mxu0 0.0
    %129 = vmatpush1.msra.mxu0 0.0
    %130 = vmatprep.subr.mxu0 0.0
    %131 = vmatpush1.msra.mxu0 0.0
    %132 = vmatprep.subr.mxu0 0.0
    %133 = vmatpush1.msra.mxu0 0.0
    %134 = vmatprep.subr.mxu0 0.0
    %135 = vmatpush1.msra.mxu0 0.0
    %136 = vmatprep.subr.mxu0 0.0
    %137 = vmatpush1.msra.mxu0 0.0
    %138 = vmatprep.subr.mxu0 0.0
    %139 = vmatpush1.msra.mxu0 0.0
    %140 = vmatprep.subr.mxu0 0.0
    %141 = vmatpush1.msra.mxu0 0.0
    %142 = vmatprep.subr.mxu0 0.0
    %143 = vmatpush1.msra.mxu0 0.0
    %144 = vmatprep.subr.mxu0 0.0
    %145 = vmatpush1.msra.mxu0 0.0
    %146 = vmatprep.subr.mxu0 0.0
    %147 = vmatpush1.msra.mxu0 0.0
    %148 = vmatprep.subr.mxu0 0.0
    %149 = vmatpush1.msra.mxu0 0.0
    %150 = vmatprep.subr.mxu0 0.0
    %151 = vmatpush1.msra.mxu0 0.0
    %152 = vmatprep.subr.mxu0 0.0
    %153 = vmatpush1.msra.mxu0 0.0
    %154 = vmatprep.subr.mxu0 0.0
    %155 = vmatpush1.msra.mxu0 0.0
    %156 = vmatprep.subr.mxu0 0.0
    %157 = vmatpush1.msra.mxu0 0.0
    %158 = vmatprep.subr.mxu0 0.0
    %159 = vmatpush1.msra.mxu0 0.0
    %160 = vmatprep.subr.mxu0 0.0
    %161 = vmatpush1.msra.mxu0 0.0
    %162 = vmatprep.subr.mxu0 0.0
    %163 = vmatpush1.msra.mxu0 0.0
    %164 = vmatprep.subr.mxu0 0.0
    %165 = vmatpush1.msra.mxu0 0.0
    %166 = vmatprep.subr.mxu0 0.0
    %167 = vmatpush1.msra.mxu0 0.0
    %168 = vmatprep.subr.mxu0 0.0
    %169 = vmatpush1.msra.mxu0 0.0
    %170 = vmatprep.subr.mxu0 0.0
    %171 = vmatpush1.msra.mxu0 0.0
    %172 = vmatprep.mubr.f32.mxu0 0.0
    %173 = vmatmul.mubr.f32.gmra.mrb[0].mxu0 %v103
    %v174 = vpop.f32.mrb[0].mxu0
    %v175 = vadd.f32 0.0, %v174
    %v176 = vpop.f32.mrb[0].mxu0
    %177 = vmatprep.mubr.f32.mxu0 0.0
    %178 = vmatmul.mubr.f32.gmra.mrb[0].mxu0 %v106
    %v179 = vpop.f32.mrb[0].mxu0
    %v180 = vadd.f32 0.0, %v179
    %v181 = vpop.f32.mrb[0].mxu0
    %182 = vdwg.mxu0
    %v183 = vld [vmem:[#allocation7] sm:$0xff]
    %v184 = vld [vmem:[#allocation7 + $0x8] sm:$0xff]
    %v185 = vld [vmem:[#allocation7 + $0x10] sm:$0xff]
    %v186 = vld [vmem:[#allocation7 + $0x18] sm:$0xff]
    %v187 = vld [vmem:[#allocation7 + $0x20] sm:$0xff]
    %v188 = vld [vmem:[#allocation7 + $0x28] sm:$0xff]
    %v189 = vld [vmem:[#allocation7 + $0x30] sm:$0xff]
    %v190 = vld [vmem:[#allocation7 + $0x38] sm:$0xff]
    %vm191 = vcmask 523264
    %v193 = vsel %vm191, %v175, 0
    %v196 = vsel %vm191, %v180, 0
    %198 = vmatprep.subr.mxu0 0.0
    %199 = vmatpush1.msra.mxu0 %v183
    %200 = vmatprep.subr.mxu0 0.0
    %201 = vmatpush1.msra.mxu0 %v184
    %202 = vmatprep.subr.mxu0 0.0
    %203 = vmatpush1.msra.mxu0 %v185
    %204 = vmatprep.subr.mxu0 0.0
    %205 = vmatpush1.msra.mxu0 %v186
    %206 = vmatprep.subr.mxu0 0.0
    %207 = vmatpush1.msra.mxu0 %v187
    %208 = vmatprep.subr.mxu0 0.0
    %209 = vmatpush1.msra.mxu0 %v188
    %210 = vmatprep.subr.mxu0 0.0
    %211 = vmatpush1.msra.mxu0 %v189
    %212 = vmatprep.subr.mxu0 0.0
    %213 = vmatpush1.msra.mxu0 %v190
    %214 = vmatprep.subr.mxu0 0.0
    %215 = vmatpush1.msra.mxu0 0.0
    %216 = vmatprep.subr.mxu0 0.0
    %217 = vmatpush1.msra.mxu0 0.0
    %218 = vmatprep.subr.mxu0 0.0
    %219 = vmatpush1.msra.mxu0 0.0
    %220 = vmatprep.subr.mxu0 0.0
    %221 = vmatpush1.msra.mxu0 0.0
    %222 = vmatprep.subr.mxu0 0.0
    %223 = vmatpush1.msra.mxu0 0.0
    %224 = vmatprep.subr.mxu0 0.0
    %225 = vmatpush1.msra.mxu0 0.0
    %226 = vmatprep.subr.mxu0 0.0
    %227 = vmatpush1.msra.mxu0 0.0
    %228 = vmatprep.subr.mxu0 0.0
    %229 = vmatpush1.msra.mxu0 0.0
    %230 = vmatprep.subr.mxu0 0.0
    %231 = vmatpush1.msra.mxu0 0.0
    %232 = vmatprep.subr.mxu0 0.0
    %233 = vmatpush1.msra.mxu0 0.0
    %234 = vmatprep.subr.mxu0 0.0
    %235 = vmatpush1.msra.mxu0 0.0
    %236 = vmatprep.subr.mxu0 0.0
    %237 = vmatpush1.msra.mxu0 0.0
    %238 = vmatprep.subr.mxu0 0.0
    %239 = vmatpush1.msra.mxu0 0.0
    %240 = vmatprep.subr.mxu0 0.0
    %241 = vmatpush1.msra.mxu0 0.0
    %242 = vmatprep.subr.mxu0 0.0
    %243 = vmatpush1.msra.mxu0 0.0
    %244 = vmatprep.subr.mxu0 0.0
    %245 = vmatpush1.msra.mxu0 0.0
    %246 = vmatprep.subr.mxu0 0.0
    %247 = vmatpush1.msra.mxu0 0.0
    %248 = vmatprep.subr.mxu0 0.0
    %249 = vmatpush1.msra.mxu0 0.0
    %250 = vmatprep.subr.mxu0 0.0
    %251 = vmatpush1.msra.mxu0 0.0
    %252 = vmatprep.subr.mxu0 0.0
    %253 = vmatpush1.msra.mxu0 0.0
    %254 = vmatprep.subr.mxu0 0.0
    %255 = vmatpush1.msra.mxu0 0.0
    %256 = vmatprep.subr.mxu0 0.0
    %257 = vmatpush1.msra.mxu0 0.0
    %258 = vmatprep.subr.mxu0 0.0
    %259 = vmatpush1.msra.mxu0 0.0
    %260 = vmatprep.subr.mxu0 0.0
    %261 = vmatpush1.msra.mxu0 0.0
    %262 = vmatprep.mubr.f32.mxu0 0.0
    %263 = vmatmul.mubr.f32.gmra.mrb[0].mxu0 %v193
    %v264 = vpop.f32.mrb[0].mxu0
    %v265 = vadd.f32 0.0, %v264
    %v266 = vpop.f32.mrb[0].mxu0
    %267 = vmatprep.mubr.f32.mxu0 0.0
    %268 = vmatmul.mubr.f32.gmra.mrb[0].mxu0 %v196
    %v269 = vpop.f32.mrb[0].mxu0
    %v270 = vadd.f32 0.0, %v269
    %v271 = vpop.f32.mrb[0].mxu0
    %272 = vdwg.mxu0
    %275 = vrot.lane.b32.xlu0 %v265, 64
    %v276 = vpop.permute.xlu0 %275
    %277 = vrot.lane.b32.xlu0 %v270, 64
    %v278 = vpop.permute.xlu0 %277
    %281 = vxpose.xlu0.b32.start [1/16] %v276, 128
    %282 = vxpose.xlu0.b32.cont [2/16] %v278, 128
    %283 = vxpose.xlu0.b32.cont [3/16] 0.0, 128
    %284 = vxpose.xlu0.b32.cont [4/16] 0.0, 128
    %285 = vxpose.xlu0.b32.cont [5/16] 0.0, 128
    %286 = vxpose.xlu0.b32.cont [6/16] 0.0, 128
    %287 = vxpose.xlu0.b32.cont [7/16] 0.0, 128
    %288 = vxpose.xlu0.b32.cont [8/16] 0.0, 128
    %289 = vxpose.xlu0.b32.cont [9/16] 0.0, 128
    %290 = vxpose.xlu0.b32.cont [10/16] 0.0, 128
    %291 = vxpose.xlu0.b32.cont [11/16] 0.0, 128
    %292 = vxpose.xlu0.b32.cont [12/16] 0.0, 128
    %293 = vxpose.xlu0.b32.cont [13/16] 0.0, 128
    %294 = vxpose.xlu0.b32.cont [14/16] 0.0, 128
    %295 = vxpose.xlu0.b32.cont [15/16] 0.0, 128
    %296 = vxpose.xlu0.b32.end [16/16] 0.0, 128
    %v297 = vpop.trf.xlu0
    %v298 = vpop.trf.xlu0
    %v299 = vpop.trf.xlu0
    %v300 = vpop.trf.xlu0
    %v301 = vpop.trf.xlu0
    %v302 = vpop.trf.xlu0
    %v303 = vpop.trf.xlu0
    %v304 = vpop.trf.xlu0
    %v305 = vpop.trf.xlu0
    %v306 = vpop.trf.xlu0
    %v307 = vpop.trf.xlu0
    %v308 = vpop.trf.xlu0
    %v309 = vpop.trf.xlu0
    %v310 = vpop.trf.xlu0
    %v311 = vpop.trf.xlu0
    %v312 = vpop.trf.xlu0
    %v314 = vrot.slane %v297, 1
    %315 = vrot.lane.b32.xlu0 %v314, 16
    %v316 = vpop.permute.xlu0 %315
    %v318 = vrot.slane %v297, 2
    %319 = vrot.lane.b32.xlu0 %v318, 32
    %v320 = vpop.permute.xlu0 %319
    %v322 = vrot.slane %v297, 3
    %323 = vrot.lane.b32.xlu0 %v322, 48
    %v324 = vpop.permute.xlu0 %323
    %vm326 = vcmask 130048
    %v327 = vsel %vm326, %v297, %v316
    %v328 = vsel %vm101, %v327, %v320
    %vm329 = vcmask 392192
    %v330 = vsel %vm329, %v328, %v324
    %v331 = vlaneseq
    %v332 = vshrl.u32 %v331, 7
    %v333 = vsub.s32 0, %v332
    %v334 = vrot.slane %v330, %v333
    %v335 = vadd.f32 %v265, %v334
    %v336 = vadd.f32 %v270, %v334
    %vm337 = vcmp.gt.f32.partialorder %v335, 0.0
    %vm338 = vcmp.gt.f32.partialorder %v336, 0.0
    %v339 = vmul.f32 %v335, 0.2
    %v340 = vmul.f32 %v336, 0.2
    %v341 = vsel %vm337, %v335, %v339
    %v342 = vsel %vm338, %v336, %v340
    %v343 = vld [vmem:[#allocation8] sm:$0xff]
    %v344 = vld [vmem:[#allocation8 + $0x8] sm:$0xff]
    %v345 = vadd.f32 %v341, %v343
    %v346 = vadd.f32 %v342, %v344
    %v347 = vsel %vm191, %v345, -inf
    %348 = vmax.xlane.f32.xlu0 %v347
    %v349 = vpop.xlane.xlu0 %348
    %v350 = vsel %vm191, %v346, -inf
    %351 = vmax.xlane.f32.xlu0 %v350
    %v352 = vpop.xlane.xlu0 %351
    %v353 = vsub.f32 %v345, %v349
    %v354 = vsub.f32 %v346, %v352
    %v355 = vmul.f32 %v353, 1.442695
    %v356 = vpow.pop %v355
    %v357 = vmul.f32 %v354, 1.442695
    %v358 = vpow.pop %v357
    %v359 = vsel %vm191, %v175, 1.0
    %v360 = vsel %vm191, %v180, 1.0
    %v361 = vld [vmem:[#allocation10] sm:$0xff]
    %v362 = vld [vmem:[#allocation10 + $0x8] sm:$0xff]
    %v363 = vld [vmem:[#allocation10 + $0x10] sm:$0xff]
    %v364 = vld [vmem:[#allocation10 + $0x18] sm:$0xff]
    %v365 = vld [vmem:[#allocation10 + $0x20] sm:$0xff]
    %v366 = vld [vmem:[#allocation10 + $0x28] sm:$0xff]
    %v367 = vld [vmem:[#allocation10 + $0x30] sm:$0xff]
    %v368 = vld [vmem:[#allocation10 + $0x38] sm:$0xff]
    %v369 = vmul.f32 %v361, %v359
    %v370 = vmul.f32 %v362, %v360
    %v371 = vmul.f32 %v363, %v359
    %v372 = vmul.f32 %v364, %v360
    %v373 = vmul.f32 %v365, %v359
    %v374 = vmul.f32 %v366, %v360
    %v375 = vmul.f32 %v367, %v359
    %v376 = vmul.f32 %v368, %v360
    %v378 = vsel %vm191, %v356, 0
    %v381 = vsel %vm191, %v358, 0
    %383 = vmatprep.subr.mxu0 0.0
    %384 = vmatpush1.msra.mxu0 %v369
    %385 = vmatprep.subr.mxu0 0.0
    %386 = vmatpush1.msra.mxu0 %v370
    %387 = vmatprep.subr.mxu0 0.0
    %388 = vmatpush1.msra.mxu0 %v371
    %389 = vmatprep.subr.mxu0 0.0
    %390 = vmatpush1.msra.mxu0 %v372
    %391 = vmatprep.subr.mxu0 0.0
    %392 = vmatpush1.msra.mxu0 %v373
    %393 = vmatprep.subr.mxu0 0.0
    %394 = vmatpush1.msra.mxu0 %v374
    %395 = vmatprep.subr.mxu0 0.0
    %396 = vmatpush1.msra.mxu0 %v375
    %397 = vmatprep.subr.mxu0 0.0
    %398 = vmatpush1.msra.mxu0 %v376
    %399 = vmatprep.subr.mxu0 0.0
    %400 = vmatpush1.msra.mxu0 0.0
    %401 = vmatprep.subr.mxu0 0.0
    %402 = vmatpush1.msra.mxu0 0.0
    %403 = vmatprep.subr.mxu0 0.0
    %404 = vmatpush1.msra.mxu0 0.0
    %405 = vmatprep.subr.mxu0 0.0
    %406 = vmatpush1.msra.mxu0 0.0
    %407 = vmatprep.subr.mxu0 0.0
    %408 = vmatpush1.msra.mxu0 0.0
    %409 = vmatprep.subr.mxu0 0.0
    %410 = vmatpush1.msra.mxu0 0.0
    %411 = vmatprep.subr.mxu0 0.0
    %412 = vmatpush1.msra.mxu0 0.0
    %413 = vmatprep.subr.mxu0 0.0
    %414 = vmatpush1.msra.mxu0 0.0
    %415 = vmatprep.subr.mxu0 0.0
    %416 = vmatpush1.msra.mxu0 0.0
    %417 = vmatprep.subr.mxu0 0.0
    %418 = vmatpush1.msra.mxu0 0.0
    %419 = vmatprep.subr.mxu0 0.0
    %420 = vmatpush1.msra.mxu0 0.0
    %421 = vmatprep.subr.mxu0 0.0
    %422 = vmatpush1.msra.mxu0 0.0
    %423 = vmatprep.subr.mxu0 0.0
    %424 = vmatpush1.msra.mxu0 0.0
    %425 = vmatprep.subr.mxu0 0.0
    %426 = vmatpush1.msra.mxu0 0.0
    %427 = vmatprep.subr.mxu0 0.0
    %428 = vmatpush1.msra.mxu0 0.0
    %429 = vmatprep.subr.mxu0 0.0
    %430 = vmatpush1.msra.mxu0 0.0
    %431 = vmatprep.subr.mxu0 0.0
    %432 = vmatpush1.msra.mxu0 0.0
    %433 = vmatprep.subr.mxu0 0.0
    %434 = vmatpush1.msra.mxu0 0.0
    %435 = vmatprep.subr.mxu0 0.0
    %436 = vmatpush1.msra.mxu0 0.0
    %437 = vmatprep.subr.mxu0 0.0
    %438 = vmatpush1.msra.mxu0 0.0
    %439 = vmatprep.subr.mxu0 0.0
    %440 = vmatpush1.msra.mxu0 0.0
    %441 = vmatprep.subr.mxu0 0.0
    %442 = vmatpush1.msra.mxu0 0.0
    %443 = vmatprep.subr.mxu0 0.0
    %444 = vmatpush1.msra.mxu0 0.0
    %445 = vmatprep.subr.mxu0 0.0
    %446 = vmatpush1.msra.mxu0 0.0
    %447 = vmatprep.mubr.f32.mxu0 0.0
    %448 = vmatmul.mubr.f32.gmra.mrb[0].mxu0 %v378
    %v449 = vpop.f32.mrb[0].mxu0
    %v450 = vadd.f32 0.0, %v449
    %v451 = vpop.f32.mrb[0].mxu0
    %452 = vmatprep.mubr.f32.mxu0 0.0
    %453 = vmatmul.mubr.f32.gmra.mrb[0].mxu0 %v381
    %v454 = vpop.f32.mrb[0].mxu0
    %v455 = vadd.f32 0.0, %v454
    %v456 = vpop.f32.mrb[0].mxu0
    %457 = vdwg.mxu0
    %v458 = vmax.f32 %v450, 1e-20
    %v459 = vmax.f32 %v455, 1e-20
    %v460 = vrcp.pop %v458
    %v461 = vrcp.pop %v459
    %v462 = vld [vmem:[%s5] sm:$0xf]
    %465 = vrot.lane.b32.xlu0 %v460, 64
    %v466 = vpop.permute.xlu0 %465
    %467 = vrot.lane.b32.xlu0 %v461, 64
    %v468 = vpop.permute.xlu0 %467
    %vm469 = vcmask 31744
    %v470 = vsel %vm469, %v466, 0
    %v472 = vsel %vm469, %v468, 0
    %vm474 = vcmask 1043456
    %v476 = vsel %vm474, %v462, 0
    %478 = vmatprep.subr.mxu0 0.0
    %479 = vmatpush1.msra.mxu0 %v476
    %480 = vmatprep.subr.mxu0 0.0
    %481 = vmatpush1.msra.mxu0 0.0
    %482 = vmatprep.subr.mxu0 0.0
    %483 = vmatpush1.msra.mxu0 0.0
    %484 = vmatprep.subr.mxu0 0.0
    %485 = vmatpush1.msra.mxu0 0.0
    %486 = vmatprep.subr.mxu0 0.0
    %487 = vmatpush1.msra.mxu0 0.0
    %488 = vmatprep.subr.mxu0 0.0
    %489 = vmatpush1.msra.mxu0 0.0
    %490 = vmatprep.subr.mxu0 0.0
    %491 = vmatpush1.msra.mxu0 0.0
    %492 = vmatprep.subr.mxu0 0.0
    %493 = vmatpush1.msra.mxu0 0.0
    %494 = vmatprep.subr.mxu0 0.0
    %495 = vmatpush1.msra.mxu0 0.0
    %496 = vmatprep.subr.mxu0 0.0
    %497 = vmatpush1.msra.mxu0 0.0
    %498 = vmatprep.subr.mxu0 0.0
    %499 = vmatpush1.msra.mxu0 0.0
    %500 = vmatprep.subr.mxu0 0.0
    %501 = vmatpush1.msra.mxu0 0.0
    %502 = vmatprep.subr.mxu0 0.0
    %503 = vmatpush1.msra.mxu0 0.0
    %504 = vmatprep.subr.mxu0 0.0
    %505 = vmatpush1.msra.mxu0 0.0
    %506 = vmatprep.subr.mxu0 0.0
    %507 = vmatpush1.msra.mxu0 0.0
    %508 = vmatprep.subr.mxu0 0.0
    %509 = vmatpush1.msra.mxu0 0.0
    %510 = vmatprep.subr.mxu0 0.0
    %511 = vmatpush1.msra.mxu0 0.0
    %512 = vmatprep.subr.mxu0 0.0
    %513 = vmatpush1.msra.mxu0 0.0
    %514 = vmatprep.subr.mxu0 0.0
    %515 = vmatpush1.msra.mxu0 0.0
    %516 = vmatprep.subr.mxu0 0.0
    %517 = vmatpush1.msra.mxu0 0.0
    %518 = vmatprep.subr.mxu0 0.0
    %519 = vmatpush1.msra.mxu0 0.0
    %520 = vmatprep.subr.mxu0 0.0
    %521 = vmatpush1.msra.mxu0 0.0
    %522 = vmatprep.subr.mxu0 0.0
    %523 = vmatpush1.msra.mxu0 0.0
    %524 = vmatprep.subr.mxu0 0.0
    %525 = vmatpush1.msra.mxu0 0.0
    %526 = vmatprep.subr.mxu0 0.0
    %527 = vmatpush1.msra.mxu0 0.0
    %528 = vmatprep.subr.mxu0 0.0
    %529 = vmatpush1.msra.mxu0 0.0
    %530 = vmatprep.subr.mxu0 0.0
    %531 = vmatpush1.msra.mxu0 0.0
    %532 = vmatprep.subr.mxu0 0.0
    %533 = vmatpush1.msra.mxu0 0.0
    %534 = vmatprep.subr.mxu0 0.0
    %535 = vmatpush1.msra.mxu0 0.0
    %536 = vmatprep.subr.mxu0 0.0
    %537 = vmatpush1.msra.mxu0 0.0
    %538 = vmatprep.subr.mxu0 0.0
    %539 = vmatpush1.msra.mxu0 0.0
    %540 = vmatprep.subr.mxu0 0.0
    %541 = vmatpush1.msra.mxu0 0.0
    %542 = vmatprep.mubr.f32.mxu0 0.0
    %543 = vmatmul.mubr.f32.gmra.mrb[0].mxu0 %v470
    %v544 = vpop.f32.mrb[0].mxu0
    %v545 = vadd.f32 0.0, %v544
    %v546 = vpop.f32.mrb[0].mxu0
    %547 = vmatprep.mubr.f32.mxu0 0.0
    %548 = vmatmul.mubr.f32.gmra.mrb[0].mxu0 %v472
    %v549 = vpop.f32.mrb[0].mxu0
    %v550 = vadd.f32 0.0, %v549
    %v551 = vpop.f32.mrb[0].mxu0
    %552 = vdwg.mxu0
    %v553 = vmul.f32 %v450, %v545
    %v554 = vmul.f32 %v455, %v550
    %v555 = vld [vmem:[%s6] sm:$0x1]
    %v557 = vlaneseq
    %v558 = vshrl.u32 %v557, 7
    %v559 = vsub.s32 0, %v558
    %v560 = vrot.slane %v555, %v559
    %v562 = vadd.f32 %v553, %v560
    %v563 = vadd.f32 %v554, %v560
    %564 = vst [vmem:[#allocation11] sm:$0xff] %v562
    %565 = vst [vmem:[#allocation11 + $0x8] sm:$0xff] %v563
    // Predicated region
    $region50: #{tpu_custom_call.1} parent=1 // pred_check
      _
    $region51: #{tpu_custom_call.1} parent=1 // pred_check_branch
      %567 = sbr.rel (0) target = $region53
    $region52: #{tpu_custom_call.1} parent=1 // pred_region
      %s569 = ssub.s32 256, 256
      %570 = vsyncadd [#allocation4], %s569
      %s571 = sshll.u32 [#allocation11], 4
      %s572 = int_to_ptr.vmem [resolvable:$true] %s571
      %577 = dma.vmem_to_hbm [thread:$0]  %s572, 256, %s7, [#allocation4], 128, 128, 8
    $region53: #{tpu_custom_call.1} parent=1 // pred_fallthru
      _
    // Predicated region
    $region54: #{tpu_custom_call.1} parent=1 // pred_check
      _
    $region55: #{tpu_custom_call.1} parent=1 // pred_check_branch
      %579 = sbr.rel (0) target = $region57
    $region56: #{tpu_custom_call.1} parent=1 // pred_region
      %580 = dma.done [#allocation4], 256
    $region57: #{tpu_custom_call.1} parent=1 // pred_fallthru
      _
    %581 = vsyncpa [#allocation3], 1
    %582 = vsyncpa [#allocation6], 1
    %583 = vsyncpa [#allocation9], 1
    %584 = vsyncpa [#allocation4], 1

</llo_original>
